<compile_context>
chip_gen: v7x
topology: tpu7x:2x2x1
jax: 0.10.0
libtpu: 0.0.40
codegen_flags: <defaults>
</compile_context>

<pallas_src>
import functools

import jax
import jax.numpy as jnp
from jax import lax
from jax.experimental import pallas as pl
from jax.experimental.pallas import tpu as pltpu


# ---------------------------------------------------------------------------
# Kernel
# ---------------------------------------------------------------------------
def _concat_attention_kernel(x_ref, w_ref, b1_ref, w2_ref, o_ref, *,
                             attention_dim, mxu_bf16, eup_bf16):
    Bt, S, H = x_ref.shape
    A = attention_dim
    mxu_dtype = jnp.bfloat16 if mxu_bf16 else jnp.float32
    eup_dtype = jnp.bfloat16 if eup_bf16 else jnp.float32

    # Cast x to the MXU dtype ONCE; reused by the f/g projection and the final
    # attention-weighted output matmul (saves a second full-tile VPU cast).
    x_mxu = x_ref[...].astype(mxu_dtype)                    # (Bt, S, H)
    x2 = x_mxu.reshape(Bt * S, H)                           # trivial reshape

    # Single fused MXU dot:  [f | g] = x @ [Wf^T | Wb^T]   (H, 2A) RHS.
    fg = jnp.dot(x2, w_ref[...].astype(mxu_dtype),
                 preferred_element_type=jnp.float32)        # (Bt*S, 2A) f32
    fg = fg.reshape(Bt, S, 2 * A)

    # Hoisted bias add: b1 is a lane-aligned (1, A) VMEM row added once to the
    # whole f block (no per-a scalar load / splat inside the unrolled loop).
    f = (fg[:, :, :A] + b1_ref[...]).astype(eup_dtype)      # (Bt, S, A)
    # One transpose so g's j values sit on the lane axis of the (S_i, S_j)
    # score tile (no per-iteration transposes inside the A loop).
    g_t = jnp.swapaxes(fg[:, :, A:], 1, 2).astype(eup_dtype)  # (Bt, A, S)

    # score[b,i,j] = sum_a w2[a] * tanh(f[b,i,a] + b1[a] + g[b,j,a]).
    # A is static (attention_dim, default 16) -> fully unrolled static slices.
    # Broadcast-add and tanh run in eup_dtype (bf16 doubles EUP throughput on
    # v6e/v7x); the accumulation over A stays f32.
    score = jnp.zeros((Bt, S, S), jnp.float32)
    for a in range(A):
        f_col = f[:, :, a:a + 1]                            # (Bt, S, 1) i on sublanes
        g_row = g_t[:, a:a + 1, :]                          # (Bt, 1, S) j on lanes
        t = jnp.tanh(f_col + g_row)                         # (Bt, S, S) eup_dtype
        score = score + w2_ref[a] * t                       # f32 scalar * t -> f32

    # Strictly-lower-triangular mask (j < i) and softmax-style normalization.
    row = lax.broadcasted_iota(jnp.int32, (S, S), 0)
    col = lax.broadcasted_iota(jnp.int32, (S, S), 1)
    flag = (col < row)[None, :, :]                          # (1, S, S) bool

    masked_score = jnp.where(flag, score, jnp.float32(-1e30))
    # Row-max subtraction (clamped at 0) cancels in the normalization below up
    # to the +1e-10 epsilon (so does the module's b2, which is dropped); it
    # keeps exp from overflowing and makes masked entries underflow to 0.
    row_max = jnp.maximum(jnp.max(masked_score, axis=-1, keepdims=True), 0.0)
    att = jnp.exp(masked_score - row_max)                   # (Bt, S, S) f32
    accum = jnp.sum(att, axis=-1, keepdims=True) + 1e-10    # (Bt, S, 1)

    # out[b,i,:] = (sum_j att[b,i,j] * x[b,j,:]) / accum[b,i]
    # (normalize AFTER the matmul: O(S*H) scaling, one reciprocal per row).
    out = jnp.einsum('bij,bjh->bih', att.astype(mxu_dtype), x_mxu,
                     preferred_element_type=jnp.float32)
    out = out * pl.reciprocal(accum, approx=False)
    o_ref[...] = out.astype(o_ref.dtype)


# ---------------------------------------------------------------------------
# Generation-aware tiling helpers
# ---------------------------------------------------------------------------
def _tpu_generation_params():
    """Returns (vmem_capacity_bytes, assume_two_tensorcores).

    Falls back to a conservative 64 MiB / dual-TC assumption (v7x-safe) if the
    hardware query is unavailable."""
    cap = 0
    try:
        cap = int(getattr(pltpu.get_tpu_info(), "vmem_capacity_bytes", 0) or 0)
    except Exception:
        cap = 0
    if cap <= 0:
        cap = 64 << 20
    two_cores = cap < (96 << 20)        # v7x-class (64 MiB VMEM) has 2 TCs/chip
    return cap, two_cores


def _per_batch_live_bytes(S, H, A, mxu_bf16):
    """f32 bytes live per batch element inside one grid step (estimate)."""
    score_tiles = 3 * S * S             # score acc + masked_score + att
    proj = 4 * S * A                    # fg + f + g_t
    io_blocks = 4 * S * H               # double-buffered x-in and out blocks
    values = 2 * S * H                  # x / out values held in the kernel
    bytes_f32 = 4 * (score_tiles + proj + io_blocks + values)
    if mxu_bf16:
        bytes_f32 += 2 * S * H          # bf16 copy of x
    return bytes_f32


def _pick_batch_tile(B, S, H, A, *, budget_bytes, two_cores, max_bt, mxu_bf16):
    """Largest divisor of B whose per-step working set fits the budget.
    On dual-TC chips keep >=2 grid steps (prefer an even count) so the batch
    axis shards evenly across both TensorCores."""
    per_batch = max(_per_batch_live_bytes(S, H, A, mxu_bf16), 1)
    cap = max(1, min(max_bt, budget_bytes // per_batch, B))
    if two_cores and B >= 2:
        cap = min(cap, max(1, B // 2))
    divisors = [d for d in range(1, cap + 1) if B % d == 0]
    if two_cores and B >= 2:
        even_steps = [d for d in divisors if (B // d) % 2 == 0]
        if even_steps:
            return max(even_steps)
    return max(divisors)


# ---------------------------------------------------------------------------
# Wrapper
# ---------------------------------------------------------------------------
def concatenation_attention(x, w1, b1, w2, b2, *, mxu_bf16=False, eup_bf16=False):
    """Pallas TPU forward of pyhealth ConcatenationAttention.

    x : (B, S, H).  PyTorch Linear shapes:
      w1: (A, 2H) = Linear(2H, A).weight   b1: (A,) = its bias
      w2: (1, A)  = Linear(A, 1).weight    b2: (1,) = its bias

    b2 is accepted for API parity but unused: an additive constant before exp
    cancels in the masked normalization (up to the +1e-10 epsilon).

    mxu_bf16: bf16 MXU operands with f32 accumulation (profitable on v5e/v6e/v7x).
    eup_bf16: bf16 broadcast-adds + tanh on the binding unit (v6e/v7x only —
              v5e has no bf16 VPU/EUP); score accumulation stays f32.
    """
    del b2
    B, S, H = x.shape
    A = w1.shape[0]

    x = jnp.asarray(x, jnp.float32)
    w1 = jnp.asarray(w1, jnp.float32)
    w_fused = jnp.concatenate([w1[:, :H].T, w1[:, H:].T], axis=1)  # (H, 2A)
    b1_row = jnp.asarray(b1, jnp.float32).reshape(1, A)            # VMEM row
    w2_vec = jnp.asarray(w2, jnp.float32).reshape(A)               # SMEM scalars

    vmem_cap, two_cores = _tpu_generation_params()
    if vmem_cap >= (96 << 20):          # v5e / v6e: 128 MiB VMEM, single TC
        budget = 28 << 20
        vmem_limit = 100 * 1024 * 1024
        max_bt = 64
    else:                               # v7x-class: 64 MiB VMEM, 2 TCs
        budget = 12 << 20
        vmem_limit = min(48 * 1024 * 1024, (vmem_cap * 3) // 4)
        max_bt = 32

    bt = _pick_batch_tile(B, S, H, A, budget_bytes=budget, two_cores=two_cores,
                          max_bt=max_bt, mxu_bf16=mxu_bf16)
    grid_steps = B // bt

    kernel = functools.partial(_concat_attention_kernel, attention_dim=A,
                               mxu_bf16=mxu_bf16, eup_bf16=eup_bf16)

    flops = B * (2 * S * (2 * A) * H        # fused f|g projection matmul
                 + 2 * S * S * H            # output matmul
                 + 3 * S * S * A            # A-loop add / scale / accumulate
                 + 8 * S * S)               # mask / max / exp / sum bookkeeping
    transcendentals = B * (S * S * A + S * S + S)          # tanh + exp + recip
    bytes_accessed = (4 * 2 * B * S * H                    # x read + out write
                      + grid_steps * 4 * (H * 2 * A + A)   # w + b1 per grid step
                      + 4 * A)                             # w2 scalars

    return pl.pallas_call(
        kernel,
        out_shape=jax.ShapeDtypeStruct((B, S, H), jnp.float32),
        grid_spec=pl.GridSpec(
            grid=(grid_steps,),
            in_specs=[
                pl.BlockSpec((bt, S, H), lambda b: (b, 0, 0)),       # x tile
                pl.BlockSpec((H, 2 * A), lambda b: (0, 0)),          # [Wf^T|Wb^T]
                pl.BlockSpec((1, A), lambda b: (0, 0)),              # b1 row (VMEM)
                pl.BlockSpec(memory_space=pltpu.MemorySpace.SMEM),   # w2 scalars
            ],
            out_specs=pl.BlockSpec((bt, S, H), lambda b: (b, 0, 0)),
        ),
        compiler_params=pltpu.CompilerParams(
            dimension_semantics=("parallel",),
            vmem_limit_bytes=int(vmem_limit),
        ),
        cost_estimate=pl.CostEstimate(
            flops=int(flops),
            transcendentals=int(transcendentals),
            bytes_accessed=int(bytes_accessed),
        ),
    )(x, w_fused, b1_row, w2_vec)


# ---------------------------------------------------------------------------
# Pure-JAX reference (transcription of the PyTorch forward pass)
# ---------------------------------------------------------------------------
def _reference(x, w1, b1, w2, b2):
    B, S, H = x.shape
    xf = jnp.broadcast_to(x[:, :, None, :], (B, S, S, H))
    xb = jnp.broadcast_to(x[:, None, :, :], (B, S, S, H))
    cat = jnp.concatenate([xf, xb], axis=-1)                 # (B, S, S, 2H)
    h = jnp.tanh(jnp.einsum('bijk,ak->bija', cat, w1) + b1)
    corr = jnp.einsum('bija,a->bij', h, w2[0]) + b2[0]
    att = jnp.exp(corr)
    flag = jnp.tril(jnp.ones((S, S), jnp.float32), -1)[None, :, :]
    masked = att * flag
    accum = jnp.sum(masked, axis=-1, keepdims=True) + 1e-10
    w = masked / accum
    return jnp.einsum('bij,bjh->bih', w, x)


if __name__ == "__main__":
    B, S, H, A = 2, 8, 32, 16

    key = jax.random.PRNGKey(0)
    kx, kw1, kb1, kw2, kb2 = jax.random.split(key, 5)

    x = jax.random.normal(kx, (B, S, H), dtype=jnp.float32)
    # Deterministic synthetic params with PyTorch Linear shapes.
    w1 = jax.random.normal(kw1, (A, 2 * H), dtype=jnp.float32) * 0.1   # Linear(2H, A).weight
    b1 = jax.random.normal(kb1, (A,), dtype=jnp.float32) * 0.1         # Linear(2H, A).bias
    w2 = jax.random.normal(kw2, (1, A), dtype=jnp.float32) * 0.1       # Linear(A, 1).weight
    b2 = jax.random.normal(kb2, (1,), dtype=jnp.float32) * 0.1         # Linear(A, 1).bias

    ref = _reference(x, w1, b1, w2, b2)

    # f32 path: must match the PyTorch-equivalent reference tightly.
    out = jax.block_until_ready(concatenation_attention(x, w1, b1, w2, b2))
    assert out.shape == (B, S, H)
    assert jnp.allclose(out, ref, rtol=1e-4, atol=1e-4), \
        f"f32 max abs err = {float(jnp.max(jnp.abs(out - ref)))}"

    # bf16 MXU + bf16 tanh fast path (v6e/v7x): loose-tolerance check vs the
    # reference (per review: finiteness alone is not enough for bf16 paths).
    out_fast = jax.block_until_ready(
        concatenation_attention(x, w1, b1, w2, b2, mxu_bf16=True, eup_bf16=True))
    assert out_fast.shape == (B, S, H)
    assert bool(jnp.all(jnp.isfinite(out_fast)))
    assert jnp.allclose(out_fast, ref, rtol=5e-2, atol=5e-2), \
        f"bf16(eup+mxu) max abs err = {float(jnp.max(jnp.abs(out_fast - ref)))}"

    # bf16 MXU only (also profitable on v5e, which has no bf16 EUP/VPU).
    out_mxu = jax.block_until_ready(
        concatenation_attention(x, w1, b1, w2, b2, mxu_bf16=True))
    assert jnp.allclose(out_mxu, ref, rtol=5e-2, atol=5e-2), \
        f"bf16(mxu) max abs err = {float(jnp.max(jnp.abs(out_mxu - ref)))}"

    print("KERNEL_OK")
</pallas_src>

<mosaic_0001>
module attributes {stable_mosaic.version = 11 : i64} {
  func.func @_concat_attention_kernel(%arg0: i32, %arg1: memref<1x8x32xf32, #tpu.memory_space<vmem>>, %arg2: memref<32x32xf32, #tpu.memory_space<vmem>>, %arg3: memref<1x16xf32, #tpu.memory_space<vmem>>, %arg4: memref<16xf32, #tpu.memory_space<smem>>, %arg5: memref<1x8x32xf32, #tpu.memory_space<vmem>>) attributes {dimension_semantics = [#tpu.dimension_semantics<parallel>], iteration_bounds = array<i64: 2>, scalar_prefetch = 0 : i64, scratch_operands = 0 : i64, tpu.core_type = #tpu.core_type<tc>, window_params = [{transform_indices = @transform_0, window_bounds = array<i64: 1, 8, 32>}, {pipeline_mode = #tpu.pipeline_mode<synchronous>, transform_indices = @transform_1, window_bounds = array<i64: 32, 32>}, {pipeline_mode = #tpu.pipeline_mode<synchronous>, transform_indices = @transform_2, window_bounds = array<i64: 1, 16>}, {transform_indices = @transform_3, window_bounds = array<i64: 16>}, {transform_indices = @transform_4, window_bounds = array<i64: 1, 8, 32>}]} {
    %c0 = arith.constant 0 : index
    %c0_0 = arith.constant 0 : index
    %c0_1 = arith.constant 0 : index
    %0 = vector.load %arg1[%c0, %c0_0, %c0_1] : memref<1x8x32xf32, #tpu.memory_space<vmem>>, vector<1x8x32xf32>
    %1 = vector.shape_cast %0 : vector<1x8x32xf32> to vector<8x32xf32>
    %c0_2 = arith.constant 0 : index
    %c0_3 = arith.constant 0 : index
    %2 = vector.load %arg2[%c0_2, %c0_3] : memref<32x32xf32, #tpu.memory_space<vmem>>, vector<32x32xf32>
    %cst = arith.constant dense<0.000000e+00> : vector<8x32xf32>
    %3 = tpu.matmul %1, %2, %cst {dimension_numbers = #tpu.dot_dimension_numbers<[1], [0], [0], [1], [0, 0, 1, 1], [], []>} : vector<8x32xf32>, vector<32x32xf32>, vector<8x32xf32> -> vector<8x32xf32>
    %4 = vector.shape_cast %3 : vector<8x32xf32> to vector<1x8x32xf32>
    %5 = vector.extract_strided_slice %4 {offsets = [0, 0, 0], sizes = [1, 8, 16], strides = [1, 1, 1]} : vector<1x8x32xf32> to vector<1x8x16xf32>
    %c0_4 = arith.constant 0 : index
    %c0_5 = arith.constant 0 : index
    %6 = vector.load %arg3[%c0_4, %c0_5] : memref<1x16xf32, #tpu.memory_space<vmem>>, vector<1x16xf32>
    %7 = vector.shape_cast %6 : vector<1x16xf32> to vector<1x1x16xf32>
    %8 = vector.broadcast %7 : vector<1x1x16xf32> to vector<1x8x16xf32>
    %9 = arith.addf %5, %8 : vector<1x8x16xf32>
    %10 = vector.extract_strided_slice %4 {offsets = [0, 0, 16], sizes = [1, 8, 16], strides = [1, 1, 1]} : vector<1x8x32xf32> to vector<1x8x16xf32>
    %11 = tpu.transpose %10, [0, 2, 1] : vector<1x8x16xf32> -> vector<1x16x8xf32>
    %cst_6 = arith.constant 0.000000e+00 : f32
    %12 = vector.broadcast %cst_6 : f32 to vector<1x8x8xf32>
    %13 = vector.extract_strided_slice %9 {offsets = [0, 0, 0], sizes = [1, 8, 1], strides = [1, 1, 1]} : vector<1x8x16xf32> to vector<1x8x1xf32>
    %14 = vector.extract_strided_slice %11 {offsets = [0, 0, 0], sizes = [1, 1, 8], strides = [1, 1, 1]} : vector<1x16x8xf32> to vector<1x1x8xf32>
    %15 = vector.broadcast %13 : vector<1x8x1xf32> to vector<1x8x8xf32>
    %16 = vector.broadcast %14 : vector<1x1x8xf32> to vector<1x8x8xf32>
    %17 = arith.addf %15, %16 : vector<1x8x8xf32>
    %18 = math.tanh %17 : vector<1x8x8xf32>
    %c0_7 = arith.constant 0 : index
    %19 = memref.load %arg4[%c0_7] : memref<16xf32, #tpu.memory_space<smem>>
    %20 = vector.broadcast %19 : f32 to vector<1x8x8xf32>
    %21 = arith.mulf %20, %18 : vector<1x8x8xf32>
    %22 = arith.addf %12, %21 : vector<1x8x8xf32>
    %23 = vector.extract_strided_slice %9 {offsets = [0, 0, 1], sizes = [1, 8, 1], strides = [1, 1, 1]} : vector<1x8x16xf32> to vector<1x8x1xf32>
    %24 = vector.extract_strided_slice %11 {offsets = [0, 1, 0], sizes = [1, 1, 8], strides = [1, 1, 1]} : vector<1x16x8xf32> to vector<1x1x8xf32>
    %25 = vector.broadcast %23 : vector<1x8x1xf32> to vector<1x8x8xf32>
    %26 = vector.broadcast %24 : vector<1x1x8xf32> to vector<1x8x8xf32>
    %27 = arith.addf %25, %26 : vector<1x8x8xf32>
    %28 = math.tanh %27 : vector<1x8x8xf32>
    %c1 = arith.constant 1 : index
    %29 = memref.load %arg4[%c1] : memref<16xf32, #tpu.memory_space<smem>>
    %30 = vector.broadcast %29 : f32 to vector<1x8x8xf32>
    %31 = arith.mulf %30, %28 : vector<1x8x8xf32>
    %32 = arith.addf %22, %31 : vector<1x8x8xf32>
    %33 = vector.extract_strided_slice %9 {offsets = [0, 0, 2], sizes = [1, 8, 1], strides = [1, 1, 1]} : vector<1x8x16xf32> to vector<1x8x1xf32>
    %34 = vector.extract_strided_slice %11 {offsets = [0, 2, 0], sizes = [1, 1, 8], strides = [1, 1, 1]} : vector<1x16x8xf32> to vector<1x1x8xf32>
    %35 = vector.broadcast %33 : vector<1x8x1xf32> to vector<1x8x8xf32>
    %36 = vector.broadcast %34 : vector<1x1x8xf32> to vector<1x8x8xf32>
    %37 = arith.addf %35, %36 : vector<1x8x8xf32>
    %38 = math.tanh %37 : vector<1x8x8xf32>
    %c2 = arith.constant 2 : index
    %39 = memref.load %arg4[%c2] : memref<16xf32, #tpu.memory_space<smem>>
    %40 = vector.broadcast %39 : f32 to vector<1x8x8xf32>
    %41 = arith.mulf %40, %38 : vector<1x8x8xf32>
    %42 = arith.addf %32, %41 : vector<1x8x8xf32>
    %43 = vector.extract_strided_slice %9 {offsets = [0, 0, 3], sizes = [1, 8, 1], strides = [1, 1, 1]} : vector<1x8x16xf32> to vector<1x8x1xf32>
    %44 = vector.extract_strided_slice %11 {offsets = [0, 3, 0], sizes = [1, 1, 8], strides = [1, 1, 1]} : vector<1x16x8xf32> to vector<1x1x8xf32>
    %45 = vector.broadcast %43 : vector<1x8x1xf32> to vector<1x8x8xf32>
    %46 = vector.broadcast %44 : vector<1x1x8xf32> to vector<1x8x8xf32>
    %47 = arith.addf %45, %46 : vector<1x8x8xf32>
    %48 = math.tanh %47 : vector<1x8x8xf32>
    %c3 = arith.constant 3 : index
    %49 = memref.load %arg4[%c3] : memref<16xf32, #tpu.memory_space<smem>>
    %50 = vector.broadcast %49 : f32 to vector<1x8x8xf32>
    %51 = arith.mulf %50, %48 : vector<1x8x8xf32>
    %52 = arith.addf %42, %51 : vector<1x8x8xf32>
    %53 = vector.extract_strided_slice %9 {offsets = [0, 0, 4], sizes = [1, 8, 1], strides = [1, 1, 1]} : vector<1x8x16xf32> to vector<1x8x1xf32>
    %54 = vector.extract_strided_slice %11 {offsets = [0, 4, 0], sizes = [1, 1, 8], strides = [1, 1, 1]} : vector<1x16x8xf32> to vector<1x1x8xf32>
    %55 = vector.broadcast %53 : vector<1x8x1xf32> to vector<1x8x8xf32>
    %56 = vector.broadcast %54 : vector<1x1x8xf32> to vector<1x8x8xf32>
    %57 = arith.addf %55, %56 : vector<1x8x8xf32>
    %58 = math.tanh %57 : vector<1x8x8xf32>
    %c4 = arith.constant 4 : index
    %59 = memref.load %arg4[%c4] : memref<16xf32, #tpu.memory_space<smem>>
    %60 = vector.broadcast %59 : f32 to vector<1x8x8xf32>
    %61 = arith.mulf %60, %58 : vector<1x8x8xf32>
    %62 = arith.addf %52, %61 : vector<1x8x8xf32>
    %63 = vector.extract_strided_slice %9 {offsets = [0, 0, 5], sizes = [1, 8, 1], strides = [1, 1, 1]} : vector<1x8x16xf32> to vector<1x8x1xf32>
    %64 = vector.extract_strided_slice %11 {offsets = [0, 5, 0], sizes = [1, 1, 8], strides = [1, 1, 1]} : vector<1x16x8xf32> to vector<1x1x8xf32>
    %65 = vector.broadcast %63 : vector<1x8x1xf32> to vector<1x8x8xf32>
    %66 = vector.broadcast %64 : vector<1x1x8xf32> to vector<1x8x8xf32>
    %67 = arith.addf %65, %66 : vector<1x8x8xf32>
    %68 = math.tanh %67 : vector<1x8x8xf32>
    %c5 = arith.constant 5 : index
    %69 = memref.load %arg4[%c5] : memref<16xf32, #tpu.memory_space<smem>>
    %70 = vector.broadcast %69 : f32 to vector<1x8x8xf32>
    %71 = arith.mulf %70, %68 : vector<1x8x8xf32>
    %72 = arith.addf %62, %71 : vector<1x8x8xf32>
    %73 = vector.extract_strided_slice %9 {offsets = [0, 0, 6], sizes = [1, 8, 1], strides = [1, 1, 1]} : vector<1x8x16xf32> to vector<1x8x1xf32>
    %74 = vector.extract_strided_slice %11 {offsets = [0, 6, 0], sizes = [1, 1, 8], strides = [1, 1, 1]} : vector<1x16x8xf32> to vector<1x1x8xf32>
    %75 = vector.broadcast %73 : vector<1x8x1xf32> to vector<1x8x8xf32>
    %76 = vector.broadcast %74 : vector<1x1x8xf32> to vector<1x8x8xf32>
    %77 = arith.addf %75, %76 : vector<1x8x8xf32>
    %78 = math.tanh %77 : vector<1x8x8xf32>
    %c6 = arith.constant 6 : index
    %79 = memref.load %arg4[%c6] : memref<16xf32, #tpu.memory_space<smem>>
    %80 = vector.broadcast %79 : f32 to vector<1x8x8xf32>
    %81 = arith.mulf %80, %78 : vector<1x8x8xf32>
    %82 = arith.addf %72, %81 : vector<1x8x8xf32>
    %83 = vector.extract_strided_slice %9 {offsets = [0, 0, 7], sizes = [1, 8, 1], strides = [1, 1, 1]} : vector<1x8x16xf32> to vector<1x8x1xf32>
    %84 = vector.extract_strided_slice %11 {offsets = [0, 7, 0], sizes = [1, 1, 8], strides = [1, 1, 1]} : vector<1x16x8xf32> to vector<1x1x8xf32>
    %85 = vector.broadcast %83 : vector<1x8x1xf32> to vector<1x8x8xf32>
    %86 = vector.broadcast %84 : vector<1x1x8xf32> to vector<1x8x8xf32>
    %87 = arith.addf %85, %86 : vector<1x8x8xf32>
    %88 = math.tanh %87 : vector<1x8x8xf32>
    %c7 = arith.constant 7 : index
    %89 = memref.load %arg4[%c7] : memref<16xf32, #tpu.memory_space<smem>>
    %90 = vector.broadcast %89 : f32 to vector<1x8x8xf32>
    %91 = arith.mulf %90, %88 : vector<1x8x8xf32>
    %92 = arith.addf %82, %91 : vector<1x8x8xf32>
    %93 = vector.extract_strided_slice %9 {offsets = [0, 0, 8], sizes = [1, 8, 1], strides = [1, 1, 1]} : vector<1x8x16xf32> to vector<1x8x1xf32>
    %94 = vector.extract_strided_slice %11 {offsets = [0, 8, 0], sizes = [1, 1, 8], strides = [1, 1, 1]} : vector<1x16x8xf32> to vector<1x1x8xf32>
    %95 = vector.broadcast %93 : vector<1x8x1xf32> to vector<1x8x8xf32>
    %96 = vector.broadcast %94 : vector<1x1x8xf32> to vector<1x8x8xf32>
    %97 = arith.addf %95, %96 : vector<1x8x8xf32>
    %98 = math.tanh %97 : vector<1x8x8xf32>
    %c8 = arith.constant 8 : index
    %99 = memref.load %arg4[%c8] : memref<16xf32, #tpu.memory_space<smem>>
    %100 = vector.broadcast %99 : f32 to vector<1x8x8xf32>
    %101 = arith.mulf %100, %98 : vector<1x8x8xf32>
    %102 = arith.addf %92, %101 : vector<1x8x8xf32>
    %103 = vector.extract_strided_slice %9 {offsets = [0, 0, 9], sizes = [1, 8, 1], strides = [1, 1, 1]} : vector<1x8x16xf32> to vector<1x8x1xf32>
    %104 = vector.extract_strided_slice %11 {offsets = [0, 9, 0], sizes = [1, 1, 8], strides = [1, 1, 1]} : vector<1x16x8xf32> to vector<1x1x8xf32>
    %105 = vector.broadcast %103 : vector<1x8x1xf32> to vector<1x8x8xf32>
    %106 = vector.broadcast %104 : vector<1x1x8xf32> to vector<1x8x8xf32>
    %107 = arith.addf %105, %106 : vector<1x8x8xf32>
    %108 = math.tanh %107 : vector<1x8x8xf32>
    %c9 = arith.constant 9 : index
    %109 = memref.load %arg4[%c9] : memref<16xf32, #tpu.memory_space<smem>>
    %110 = vector.broadcast %109 : f32 to vector<1x8x8xf32>
    %111 = arith.mulf %110, %108 : vector<1x8x8xf32>
    %112 = arith.addf %102, %111 : vector<1x8x8xf32>
    %113 = vector.extract_strided_slice %9 {offsets = [0, 0, 10], sizes = [1, 8, 1], strides = [1, 1, 1]} : vector<1x8x16xf32> to vector<1x8x1xf32>
    %114 = vector.extract_strided_slice %11 {offsets = [0, 10, 0], sizes = [1, 1, 8], strides = [1, 1, 1]} : vector<1x16x8xf32> to vector<1x1x8xf32>
    %115 = vector.broadcast %113 : vector<1x8x1xf32> to vector<1x8x8xf32>
    %116 = vector.broadcast %114 : vector<1x1x8xf32> to vector<1x8x8xf32>
    %117 = arith.addf %115, %116 : vector<1x8x8xf32>
    %118 = math.tanh %117 : vector<1x8x8xf32>
    %c10 = arith.constant 10 : index
    %119 = memref.load %arg4[%c10] : memref<16xf32, #tpu.memory_space<smem>>
    %120 = vector.broadcast %119 : f32 to vector<1x8x8xf32>
    %121 = arith.mulf %120, %118 : vector<1x8x8xf32>
    %122 = arith.addf %112, %121 : vector<1x8x8xf32>
    %123 = vector.extract_strided_slice %9 {offsets = [0, 0, 11], sizes = [1, 8, 1], strides = [1, 1, 1]} : vector<1x8x16xf32> to vector<1x8x1xf32>
    %124 = vector.extract_strided_slice %11 {offsets = [0, 11, 0], sizes = [1, 1, 8], strides = [1, 1, 1]} : vector<1x16x8xf32> to vector<1x1x8xf32>
    %125 = vector.broadcast %123 : vector<1x8x1xf32> to vector<1x8x8xf32>
    %126 = vector.broadcast %124 : vector<1x1x8xf32> to vector<1x8x8xf32>
    %127 = arith.addf %125, %126 : vector<1x8x8xf32>
    %128 = math.tanh %127 : vector<1x8x8xf32>
    %c11 = arith.constant 11 : index
    %129 = memref.load %arg4[%c11] : memref<16xf32, #tpu.memory_space<smem>>
    %130 = vector.broadcast %129 : f32 to vector<1x8x8xf32>
    %131 = arith.mulf %130, %128 : vector<1x8x8xf32>
    %132 = arith.addf %122, %131 : vector<1x8x8xf32>
    %133 = vector.extract_strided_slice %9 {offsets = [0, 0, 12], sizes = [1, 8, 1], strides = [1, 1, 1]} : vector<1x8x16xf32> to vector<1x8x1xf32>
    %134 = vector.extract_strided_slice %11 {offsets = [0, 12, 0], sizes = [1, 1, 8], strides = [1, 1, 1]} : vector<1x16x8xf32> to vector<1x1x8xf32>
    %135 = vector.broadcast %133 : vector<1x8x1xf32> to vector<1x8x8xf32>
    %136 = vector.broadcast %134 : vector<1x1x8xf32> to vector<1x8x8xf32>
    %137 = arith.addf %135, %136 : vector<1x8x8xf32>
    %138 = math.tanh %137 : vector<1x8x8xf32>
    %c12 = arith.constant 12 : index
    %139 = memref.load %arg4[%c12] : memref<16xf32, #tpu.memory_space<smem>>
    %140 = vector.broadcast %139 : f32 to vector<1x8x8xf32>
    %141 = arith.mulf %140, %138 : vector<1x8x8xf32>
    %142 = arith.addf %132, %141 : vector<1x8x8xf32>
    %143 = vector.extract_strided_slice %9 {offsets = [0, 0, 13], sizes = [1, 8, 1], strides = [1, 1, 1]} : vector<1x8x16xf32> to vector<1x8x1xf32>
    %144 = vector.extract_strided_slice %11 {offsets = [0, 13, 0], sizes = [1, 1, 8], strides = [1, 1, 1]} : vector<1x16x8xf32> to vector<1x1x8xf32>
    %145 = vector.broadcast %143 : vector<1x8x1xf32> to vector<1x8x8xf32>
    %146 = vector.broadcast %144 : vector<1x1x8xf32> to vector<1x8x8xf32>
    %147 = arith.addf %145, %146 : vector<1x8x8xf32>
    %148 = math.tanh %147 : vector<1x8x8xf32>
    %c13 = arith.constant 13 : index
    %149 = memref.load %arg4[%c13] : memref<16xf32, #tpu.memory_space<smem>>
    %150 = vector.broadcast %149 : f32 to vector<1x8x8xf32>
    %151 = arith.mulf %150, %148 : vector<1x8x8xf32>
    %152 = arith.addf %142, %151 : vector<1x8x8xf32>
    %153 = vector.extract_strided_slice %9 {offsets = [0, 0, 14], sizes = [1, 8, 1], strides = [1, 1, 1]} : vector<1x8x16xf32> to vector<1x8x1xf32>
    %154 = vector.extract_strided_slice %11 {offsets = [0, 14, 0], sizes = [1, 1, 8], strides = [1, 1, 1]} : vector<1x16x8xf32> to vector<1x1x8xf32>
    %155 = vector.broadcast %153 : vector<1x8x1xf32> to vector<1x8x8xf32>
    %156 = vector.broadcast %154 : vector<1x1x8xf32> to vector<1x8x8xf32>
    %157 = arith.addf %155, %156 : vector<1x8x8xf32>
    %158 = math.tanh %157 : vector<1x8x8xf32>
    %c14 = arith.constant 14 : index
    %159 = memref.load %arg4[%c14] : memref<16xf32, #tpu.memory_space<smem>>
    %160 = vector.broadcast %159 : f32 to vector<1x8x8xf32>
    %161 = arith.mulf %160, %158 : vector<1x8x8xf32>
    %162 = arith.addf %152, %161 : vector<1x8x8xf32>
    %163 = vector.extract_strided_slice %9 {offsets = [0, 0, 15], sizes = [1, 8, 1], strides = [1, 1, 1]} : vector<1x8x16xf32> to vector<1x8x1xf32>
    %164 = vector.extract_strided_slice %11 {offsets = [0, 15, 0], sizes = [1, 1, 8], strides = [1, 1, 1]} : vector<1x16x8xf32> to vector<1x1x8xf32>
    %165 = vector.broadcast %163 : vector<1x8x1xf32> to vector<1x8x8xf32>
    %166 = vector.broadcast %164 : vector<1x1x8xf32> to vector<1x8x8xf32>
    %167 = arith.addf %165, %166 : vector<1x8x8xf32>
    %168 = math.tanh %167 : vector<1x8x8xf32>
    %c15 = arith.constant 15 : index
    %169 = memref.load %arg4[%c15] : memref<16xf32, #tpu.memory_space<smem>>
    %170 = vector.broadcast %169 : f32 to vector<1x8x8xf32>
    %171 = arith.mulf %170, %168 : vector<1x8x8xf32>
    %172 = arith.addf %162, %171 : vector<1x8x8xf32>
    %173 = tpu.iota {dimensions = array<i32: 0>} : vector<8x8xi32>
    %174 = tpu.iota {dimensions = array<i32: 1>} : vector<8x8xi32>
    %175 = arith.cmpi slt, %174, %173 : vector<8x8xi32>
    %176 = vector.shape_cast %175 : vector<8x8xi1> to vector<1x8x8xi1>
    %cst_8 = arith.constant -1.000000e+30 : f32
    %177 = vector.broadcast %cst_8 : f32 to vector<1x8x8xf32>
    %178 = arith.select %176, %172, %177 : vector<1x8x8xi1>, vector<1x8x8xf32>
    %cst_9 = arith.constant dense<0xFF800000> : vector<1x8xf32>
    %179 = vector.multi_reduction <maximumf>, %178, %cst_9 [2] : vector<1x8x8xf32> to vector<1x8xf32>
    %180 = vector.shape_cast %179 : vector<1x8xf32> to vector<1x8x1xf32>
    %cst_10 = arith.constant 0.000000e+00 : f32
    %181 = vector.broadcast %cst_10 : f32 to vector<1x8x1xf32>
    %182 = arith.maximumf %180, %181 : vector<1x8x1xf32>
    %183 = vector.broadcast %182 : vector<1x8x1xf32> to vector<1x8x8xf32>
    %184 = arith.subf %178, %183 : vector<1x8x8xf32>
    %185 = math.exp %184 : vector<1x8x8xf32>
    %cst_11 = arith.constant dense<0.000000e+00> : vector<1x8xf32>
    %186 = vector.multi_reduction <add>, %185, %cst_11 [2] : vector<1x8x8xf32> to vector<1x8xf32>
    %187 = vector.shape_cast %186 : vector<1x8xf32> to vector<1x8x1xf32>
    %cst_12 = arith.constant 1.000000e-10 : f32
    %188 = vector.broadcast %cst_12 : f32 to vector<1x8x1xf32>
    %189 = arith.addf %187, %188 : vector<1x8x1xf32>
    "tpu.trace_start"() <{level = 10 : i32, message = "bij,bjh->bih"}> : () -> ()
    %cst_13 = arith.constant dense<0.000000e+00> : vector<1x8x32xf32>
    %190 = tpu.matmul %185, %0, %cst_13 {dimension_numbers = #tpu.dot_dimension_numbers<[2], [1], [1], [2], [0, 0, 0, 1, 1, 2], [0], [0]>} : vector<1x8x8xf32>, vector<1x8x32xf32>, vector<1x8x32xf32> -> vector<1x8x32xf32>
    "tpu.trace_stop"() : () -> ()
    %191 = tpu.reciprocal %189 : vector<1x8x1xf32> -> vector<1x8x1xf32>
    %192 = vector.broadcast %191 : vector<1x8x1xf32> to vector<1x8x32xf32>
    %193 = arith.mulf %190, %192 : vector<1x8x32xf32>
    %c0_14 = arith.constant 0 : index
    %c0_15 = arith.constant 0 : index
    %c0_16 = arith.constant 0 : index
    %194 = vector.load %arg5[%c0_14, %c0_15, %c0_16] : memref<1x8x32xf32, #tpu.memory_space<vmem>>, vector<1x8x32xf32>
    tpu.vector_store %arg5[%c0_14, %c0_15, %c0_16], %193 {strides = array<i32>} : memref<1x8x32xf32, #tpu.memory_space<vmem>>, vector<1x8x32xf32>,
    return
  }
  func.func @transform_0(%arg0: i32) -> (i32, i32, i32) {
    %c0_i32 = arith.constant 0 : i32
    %c0_i32_0 = arith.constant 0 : i32
    %c0_i32_1 = arith.constant 0 : i32
    return %arg0, %c0_i32, %c0_i32_0 : i32, i32, i32
  }
  func.func @transform_1(%arg0: i32) -> (i32, i32) {
    %c0_i32 = arith.constant 0 : i32
    %c0_i32_0 = arith.constant 0 : i32
    %c0_i32_1 = arith.constant 0 : i32
    return %c0_i32, %c0_i32_0 : i32, i32
  }
  func.func @transform_2(%arg0: i32) -> (i32, i32) {
    %c0_i32 = arith.constant 0 : i32
    %c0_i32_0 = arith.constant 0 : i32
    %c0_i32_1 = arith.constant 0 : i32
    return %c0_i32, %c0_i32_0 : i32, i32
  }
  func.func @transform_3(%arg0: i32) -> i32 {
    %c0_i32 = arith.constant 0 : i32
    %c0_i32_0 = arith.constant 0 : i32
    return %c0_i32 : i32
  }
  func.func @transform_4(%arg0: i32) -> (i32, i32, i32) {
    %c0_i32 = arith.constant 0 : i32
    %c0_i32_0 = arith.constant 0 : i32
    %c0_i32_1 = arith.constant 0 : i32
    return %arg0, %c0_i32, %c0_i32_0 : i32, i32, i32
  }
}

</mosaic_0001>

<llo_original>
// kernel: tpu_custom_call.1
$region0: #{tpu_custom_call.1}
  #allocation0 [shape = 'u32[]', space=smem, size = 0x4, offset = 0x4, fixed_abs, tag = 'smem constant byte address 0x4 - core index']
  #allocation1 [shape = 'u32[144,128]{1,0:T(1,128)}', space=vmem, size = 0x12000, scoped, tag = 'internal scratch']
  %s0 = inlined_call_operand.hbm [shape: f32[2,8,32], index: 0, kind: input, shape index: {}]
  %s1 = inlined_call_operand.hbm [shape: f32[32,32], index: 1, kind: input, shape index: {}]
  %s2 = inlined_call_operand.vmem [shape: f32[1,16], index: 2, kind: input, shape index: {}]
  %s3 = inlined_call_operand.vmem [shape: f32[16], index: 3, kind: input, shape index: {}]
  %s4 = inlined_call_operand.hbm [shape: f32[2,8,32], index: 4, kind: output, shape index: {}]
  %s5 = sld [smem:[#allocation0]]
  $region61: #{tpu_custom_call.1} parent=0
    _
  %s7 = ssub.s32 1, %s5
  %s8 = scalar_select 0, %s7, %s5
  $region1: #{tpu_custom_call.1} parent=0
    #allocation2 [shape = 'u8[8192]{0}', space=vmem, size = 0x2000, scoped, tag = 'input window, operand 0']
    #allocation3 [shape = 's32[2]{0}', space=sflag, size = 0x8, scoped, tag = 'scoped memory for tpu_custom_call.1']
    #allocation4 [shape = 's32[2]{0}', space=sflag, size = 0x8, scoped, tag = 'scoped memory for tpu_custom_call.1']
    #allocation5 [shape = 's32[2]{0}', space=sflag, size = 0x8, scoped, tag = 'scoped memory for tpu_custom_call.1']
    #allocation6 [shape = 'u8[16384]{0}', space=vmem, size = 0x4000, scoped, tag = 'input window, operand 1, single buffered']
    #allocation7 [shape = 's32[1]{0}', space=sflag, size = 0x4, scoped, tag = 'scoped memory for tpu_custom_call.1']
    #allocation8 [shape = 'u8[512]{0}', space=smem, size = 0x200, scoped, tag = 'input window, operand 3, single buffered']
    #allocation9 [shape = 'u8[8192]{0}', space=vmem, size = 0x2000, scoped, tag = 'output window, operand 0']
    %9 = vsyncpa [#allocation3], 0
    %s10 = scalar_lea.sflag [#allocation3], 1
    %11 = vsyncpa %s10, 0
    %12 = vsyncpa [#allocation7], 0
    %13 = vsyncpa [#allocation5], 0
    %14 = vsyncpa [#allocation4], 0
    %s15 = scalar_lea.sflag [#allocation4], 1
    %16 = vsyncpa %s15, 0
    loop: start=0, step=1, limit=4
    $region2: #{tpu_custom_call.1} parent=1 // loop_pre_header
      _
    $region3: #{tpu_custom_call.1} parent=1 // loop_header
      %s18 = sphi 0, %s22
      %p19 = scmp.ge.s32.totalorder %s18, 4
      %s28 = sphi 0, %s30
      %s31 = sphi 0, %s28
      %s32 = sphi 0, %s31
      %s48 = sphi 0, %s32
      %s52 = sphi 0, %s52
      %s54 = sphi 0, %s52
      %s55 = sphi 0, %s54
      %s69 = sphi 0, %s55
      %s73 = sphi 0, %s73
      %s75 = sphi 0, %s73
      %s76 = sphi 0, %s75
      %s90 = sphi 0, %s76
      %s94 = sphi 0, %s94
      %s96 = sphi 0, %s94
      %s97 = sphi 0, %s96
      %s111 = sphi 0, %s97
      %s117 = sphi 0, %s119
      %s120 = sphi 0, %s117
      %s121 = sphi 0, %s120
      %s137 = sphi 0, %s121
    $region4: #{tpu_custom_call.1} parent=1 // loop_header_branch
      %21 = sbr.rel (%p19) target = $region8
    $region5: #{tpu_custom_call.1} parent=1 // loop_body
      %s23 = ssub.s32 %s18, 1
      %s24 = ssub.s32 %s18, 2
      %s25 = sadd.s32 %s18, 1
      %s26 = ssub.s32 %s18, %s25
      %p27 = scmp.eq.s32.totalorder %s26, 0
      %s29 = sadd.s32 %s28, 1
      %s30 = scalar_select %p27, %s28, %s29
      %p33 = pneg %p27
      %p34 = scmp.eq.s32.totalorder %s18, 1
      %p35 = por %p33, %p34
      %p36 = scmp.ne.s32.totalorder %s28, %s31
      %p37 = scmp.eq.s32.totalorder %s18, 0
      %p38 = por %p36, %p37
      %p39 = scmp.ne.s32.totalorder %s28, %s31
      %p40 = scmp.eq.s32.totalorder %s23, 1
      %p41 = por %p39, %p40
      %p42 = scmp.ne.s32.totalorder %s31, %s32
      %p43 = scmp.eq.s32.totalorder %s23, 0
      %p44 = por %p42, %p43
      %p45 = scmp.ne.s32.totalorder %s31, %s32
      %p46 = scmp.eq.s32.totalorder %s24, 1
      %p47 = por %p45, %p46
      %p49 = scmp.ne.s32.totalorder %s32, %s48
      %p50 = scmp.eq.s32.totalorder %s24, 0
      %p51 = por %p49, %p50
      %s53 = sadd.s32 %s52, 1
      %p56 = scmp.eq.s32.totalorder %s18, 1
      %p57 = scmp.ne.s32.totalorder %s52, %s54
      %p58 = scmp.eq.s32.totalorder %s18, 0
      %p59 = por %p57, %p58
      %p60 = scmp.ne.s32.totalorder %s52, %s54
      %p61 = scmp.eq.s32.totalorder %s23, 1
      %p62 = por %p60, %p61
      %p63 = scmp.ne.s32.totalorder %s54, %s55
      %p64 = scmp.eq.s32.totalorder %s23, 0
      %p65 = por %p63, %p64
      %p66 = scmp.ne.s32.totalorder %s54, %s55
      %p67 = scmp.eq.s32.totalorder %s24, 1
      %p68 = por %p66, %p67
      %p70 = scmp.ne.s32.totalorder %s55, %s69
      %p71 = scmp.eq.s32.totalorder %s24, 0
      %p72 = por %p70, %p71
      %s74 = sadd.s32 %s73, 1
      %p77 = scmp.eq.s32.totalorder %s18, 1
      %p78 = scmp.ne.s32.totalorder %s73, %s75
      %p79 = scmp.eq.s32.totalorder %s18, 0
      %p80 = por %p78, %p79
      %p81 = scmp.ne.s32.totalorder %s73, %s75
      %p82 = scmp.eq.s32.totalorder %s23, 1
      %p83 = por %p81, %p82
      %p84 = scmp.ne.s32.totalorder %s75, %s76
      %p85 = scmp.eq.s32.totalorder %s23, 0
      %p86 = por %p84, %p85
      %p87 = scmp.ne.s32.totalorder %s75, %s76
      %p88 = scmp.eq.s32.totalorder %s24, 1
      %p89 = por %p87, %p88
      %p91 = scmp.ne.s32.totalorder %s76, %s90
      %p92 = scmp.eq.s32.totalorder %s24, 0
      %p93 = por %p91, %p92
      %s95 = sadd.s32 %s94, 1
      %p98 = scmp.eq.s32.totalorder %s18, 1
      %p99 = scmp.ne.s32.totalorder %s94, %s96
      %p100 = scmp.eq.s32.totalorder %s18, 0
      %p101 = por %p99, %p100
      %p102 = scmp.ne.s32.totalorder %s94, %s96
      %p103 = scmp.eq.s32.totalorder %s23, 1
      %p104 = por %p102, %p103
      %p105 = scmp.ne.s32.totalorder %s96, %s97
      %p106 = scmp.eq.s32.totalorder %s23, 0
      %p107 = por %p105, %p106
      %p108 = scmp.ne.s32.totalorder %s96, %s97
      %p109 = scmp.eq.s32.totalorder %s24, 1
      %p110 = por %p108, %p109
      %p112 = scmp.ne.s32.totalorder %s97, %s111
      %p113 = scmp.eq.s32.totalorder %s24, 0
      %p114 = por %p112, %p113
      %s115 = ssub.s32 %s18, %s25
      %p116 = scmp.eq.s32.totalorder %s115, 0
      %s118 = sadd.s32 %s117, 1
      %s119 = scalar_select %p116, %s117, %s118
      %p122 = pneg %p116
      %p123 = scmp.eq.s32.totalorder %s18, 1
      %p124 = por %p122, %p123
      %p125 = scmp.ne.s32.totalorder %s117, %s120
      %p126 = scmp.eq.s32.totalorder %s18, 0
      %p127 = por %p125, %p126
      %p128 = scmp.ne.s32.totalorder %s117, %s120
      %p129 = scmp.eq.s32.totalorder %s23, 1
      %p130 = por %p128, %p129
      %p131 = scmp.ne.s32.totalorder %s120, %s121
      %p132 = scmp.eq.s32.totalorder %s23, 0
      %p133 = por %p131, %p132
      %p134 = scmp.ne.s32.totalorder %s120, %s121
      %p135 = scmp.eq.s32.totalorder %s24, 1
      %p136 = por %p134, %p135
      %p138 = scmp.ne.s32.totalorder %s121, %s137
      %p139 = scmp.eq.s32.totalorder %s24, 0
      %p140 = por %p138, %p139
      %p141 = scmp.le.s32.totalorder 1, %s18
      %p142 = scmp.lt.s32.totalorder %s18, 3
      %p143 = pnand %p141, %p142
      %p144 = pneg %p143
      // Predicated region
      $region9: #{tpu_custom_call.1} parent=5 // pred_check
        _
      $region10: #{tpu_custom_call.1} parent=5 // pred_check_branch
        %146 = sbr.rel (%p143) target = $region12
      $region11: #{tpu_custom_call.1} parent=5 // pred_region
        %s147 = ssub.s32 %s18, 1
        // Predicated region
        $region13: #{tpu_custom_call.1} parent=11 // pred_check
          %p148 = pneg %p65
        $region14: #{tpu_custom_call.1} parent=11 // pred_check_branch
          %150 = sbr.rel (%p148) target = $region16
        $region15: #{tpu_custom_call.1} parent=11 // pred_region
          %s152 = ssub.s32 512, 512
          %153 = vsyncadd [#allocation7], %s152
          %s154 = sshll.u32 [#allocation6], 4
          %s155 = int_to_ptr.vmem [resolvable:$true] %s154
          %160 = dma.hbm_to_vmem [thread:$0]  %s1, 512, %s155, [#allocation7], 128, 128, 8
        $region16: #{tpu_custom_call.1} parent=11 // pred_fallthru
          _
        // Predicated region
        $region17: #{tpu_custom_call.1} parent=11 // pred_check
          %p161 = pneg %p86
        $region18: #{tpu_custom_call.1} parent=11 // pred_check_branch
          %163 = sbr.rel (%p161) target = $region20
        $region19: #{tpu_custom_call.1} parent=11 // pred_region
          _
        $region20: #{tpu_custom_call.1} parent=11 // pred_fallthru
          _
        // Predicated region
        $region21: #{tpu_custom_call.1} parent=11 // pred_check
          %p164 = pneg %p107
        $region22: #{tpu_custom_call.1} parent=11 // pred_check_branch
          %166 = sbr.rel (%p164) target = $region24
        $region23: #{tpu_custom_call.1} parent=11 // pred_region
          %s168 = ssub.s32 16, 16
          %169 = vsyncadd [#allocation5], %s168
          %s171 = sshll.u32 %s3, 4
          %s172 = int_to_ptr.vmem [resolvable:$true] %s171
          %174 = dma.vmem_to_smem %s172, 16, [#allocation8], [#allocation5]
        $region24: #{tpu_custom_call.1} parent=11 // pred_fallthru
          _
      $region12: #{tpu_custom_call.1} parent=5 // pred_fallthru
        _
      %p175 = scmp.lt.s32.totalorder %s18, 2
      // Predicated region
      $region25: #{tpu_custom_call.1} parent=5 // pred_check
        %p176 = pneg %p175
      $region26: #{tpu_custom_call.1} parent=5 // pred_check_branch
        %178 = sbr.rel (%p176) target = $region28
      $region27: #{tpu_custom_call.1} parent=5 // pred_region
        // Predicated region
        $region29: #{tpu_custom_call.1} parent=27 // pred_check
          %p179 = pneg %p38
        $region30: #{tpu_custom_call.1} parent=27 // pred_check_branch
          %181 = sbr.rel (%p179) target = $region32
        $region31: #{tpu_custom_call.1} parent=27 // pred_region
          %s182 = sand.u32 %s28, 1
          %s183 = scalar_lea.sflag [#allocation3], %s182
          %s184 = sand.u32 %s28, 1
          %s185 = smul.addr %s184, 8
          %s186 = scalar_lea.vmem [#allocation2], %s185
          %s188 = ssub.s32 128, 128
          %189 = vsyncadd %s183, %s188
          %s190 = smul.addr %s18, 128
          %s191 = scalar_lea.hbm %s0, %s190
          %s193 = sshll.u32 %s186, 4
          %s194 = int_to_ptr.vmem [resolvable:$true] %s193
          %196 = dma.hbm_to_vmem [thread:$0]  %s191, 128, %s194, %s183
        $region32: #{tpu_custom_call.1} parent=27 // pred_fallthru
          _
      $region28: #{tpu_custom_call.1} parent=5 // pred_fallthru
        _
      %p197 = scmp.le.s32.totalorder 1, %s18
      %p198 = scmp.lt.s32.totalorder %s18, 3
      %p199 = pnand %p197, %p198
      %p200 = pneg %p199
      // Predicated region
      $region33: #{tpu_custom_call.1} parent=5 // pred_check
        _
      $region34: #{tpu_custom_call.1} parent=5 // pred_check_branch
        %202 = sbr.rel (%p199) target = $region36
      $region35: #{tpu_custom_call.1} parent=5 // pred_region
        %s203 = ssub.s32 %s18, 1
        %s204 = sand.u32 %s31, 1
        %s205 = scalar_lea.sflag [#allocation3], %s204
        %s206 = sand.u32 %s31, 1
        %s207 = smul.addr %s206, 8
        %s208 = scalar_lea.vmem [#allocation2], %s207
        // Predicated region
        $region37: #{tpu_custom_call.1} parent=35 // pred_check
          %p209 = pneg %p44
        $region38: #{tpu_custom_call.1} parent=35 // pred_check_branch
          %211 = sbr.rel (%p209) target = $region40
        $region39: #{tpu_custom_call.1} parent=35 // pred_region
          %212 = dma.done %s205, 128
        $region40: #{tpu_custom_call.1} parent=35 // pred_fallthru
          _
        // Predicated region
        $region41: #{tpu_custom_call.1} parent=35 // pred_check
          %p213 = pneg %p65
        $region42: #{tpu_custom_call.1} parent=35 // pred_check_branch
          %215 = sbr.rel (%p213) target = $region44
        $region43: #{tpu_custom_call.1} parent=35 // pred_region
          %216 = dma.done [#allocation7], 512
        $region44: #{tpu_custom_call.1} parent=35 // pred_fallthru
          _
        // Predicated region
        $region45: #{tpu_custom_call.1} parent=35 // pred_check
          %p217 = pneg %p107
        $region46: #{tpu_custom_call.1} parent=35 // pred_check_branch
          %219 = sbr.rel (%p217) target = $region48
        $region47: #{tpu_custom_call.1} parent=35 // pred_region
          %220 = dma.done [#allocation5], 16
        $region48: #{tpu_custom_call.1} parent=35 // pred_fallthru
          _
        %221 = sfence
        %s222 = sand.u32 %s31, 1
        %s223 = scalar_lea.sflag [#allocation3], %s222
        %s224 = sand.u32 %s31, 1
        %s225 = smul.addr %s224, 8
        %s226 = scalar_lea.vmem [#allocation2], %s225
        %p227 = pneg %p44
        %p228 = pneg %p41
        %p229 = pneg %p65
        %p230 = pneg %p62
        %p231 = pneg %p86
        %p232 = pneg %p83
        %p233 = pneg %p107
        %p234 = pneg %p104
        %p235 = pneg %p133
        %p236 = pneg %p130
        %s237 = sand.u32 %s120, 1
        %s238 = scalar_lea.sflag [#allocation4], %s237
        %s239 = sand.u32 %s120, 1
        %s240 = smul.addr %s239, 8
        %s241 = scalar_lea.vmem [#allocation9], %s240
        %v242 = vld [vmem:[%s208] sm:$0xff]
        %v243 = vld [vmem:[#allocation6] sm:$0xff]
        %v244 = vld [vmem:[#allocation6 + $0x8] sm:$0xff]
        %v245 = vld [vmem:[#allocation6 + $0x10] sm:$0xff]
        %v246 = vld [vmem:[#allocation6 + $0x18] sm:$0xff]
        %vm247 = vcmask 261120
        %v249 = vsel %vm247, %v242, 0
        %251 = vmatprep.subr.mxu0 0.0
        %252 = vmatpush1.msra.mxu0 %v243
        %253 = vmatprep.subr.mxu0 0.0
        %254 = vmatpush1.msra.mxu0 %v244
        %255 = vmatprep.subr.mxu0 0.0
        %256 = vmatpush1.msra.mxu0 %v245
        %257 = vmatprep.subr.mxu0 0.0
        %258 = vmatpush1.msra.mxu0 %v246
        %259 = vmatprep.subr.mxu0 0.0
        %260 = vmatpush1.msra.mxu0 0.0
        %261 = vmatprep.subr.mxu0 0.0
        %262 = vmatpush1.msra.mxu0 0.0
        %263 = vmatprep.subr.mxu0 0.0
        %264 = vmatpush1.msra.mxu0 0.0
        %265 = vmatprep.subr.mxu0 0.0
        %266 = vmatpush1.msra.mxu0 0.0
        %267 = vmatprep.subr.mxu0 0.0
        %268 = vmatpush1.msra.mxu0 0.0
        %269 = vmatprep.subr.mxu0 0.0
        %270 = vmatpush1.msra.mxu0 0.0
        %271 = vmatprep.subr.mxu0 0.0
        %272 = vmatpush1.msra.mxu0 0.0
        %273 = vmatprep.subr.mxu0 0.0
        %274 = vmatpush1.msra.mxu0 0.0
        %275 = vmatprep.subr.mxu0 0.0
        %276 = vmatpush1.msra.mxu0 0.0
        %277 = vmatprep.subr.mxu0 0.0
        %278 = vmatpush1.msra.mxu0 0.0
        %279 = vmatprep.subr.mxu0 0.0
        %280 = vmatpush1.msra.mxu0 0.0
        %281 = vmatprep.subr.mxu0 0.0
        %282 = vmatpush1.msra.mxu0 0.0
        %283 = vmatprep.subr.mxu0 0.0
        %284 = vmatpush1.msra.mxu0 0.0
        %285 = vmatprep.subr.mxu0 0.0
        %286 = vmatpush1.msra.mxu0 0.0
        %287 = vmatprep.subr.mxu0 0.0
        %288 = vmatpush1.msra.mxu0 0.0
        %289 = vmatprep.subr.mxu0 0.0
        %290 = vmatpush1.msra.mxu0 0.0
        %291 = vmatprep.subr.mxu0 0.0
        %292 = vmatpush1.msra.mxu0 0.0
        %293 = vmatprep.subr.mxu0 0.0
        %294 = vmatpush1.msra.mxu0 0.0
        %295 = vmatprep.subr.mxu0 0.0
        %296 = vmatpush1.msra.mxu0 0.0
        %297 = vmatprep.subr.mxu0 0.0
        %298 = vmatpush1.msra.mxu0 0.0
        %299 = vmatprep.subr.mxu0 0.0
        %300 = vmatpush1.msra.mxu0 0.0
        %301 = vmatprep.subr.mxu0 0.0
        %302 = vmatpush1.msra.mxu0 0.0
        %303 = vmatprep.subr.mxu0 0.0
        %304 = vmatpush1.msra.mxu0 0.0
        %305 = vmatprep.subr.mxu0 0.0
        %306 = vmatpush1.msra.mxu0 0.0
        %307 = vmatprep.subr.mxu0 0.0
        %308 = vmatpush1.msra.mxu0 0.0
        %309 = vmatprep.subr.mxu0 0.0
        %310 = vmatpush1.msra.mxu0 0.0
        %311 = vmatprep.subr.mxu0 0.0
        %312 = vmatpush1.msra.mxu0 0.0
        %313 = vmatprep.subr.mxu0 0.0
        %314 = vmatpush1.msra.mxu0 0.0
        %315 = vmatprep.mubr.f32.mxu0 0.0
        %316 = vmatmul.mubr.f32.gmra.mrb[0].mxu0 %v249
        %v317 = vpop.f32.mrb[0].mxu0
        %v318 = vadd.f32 0.0, %v317
        %v319 = vpop.f32.mrb[0].mxu0
        %320 = vdwg.mxu0
        %v321 = vld [vmem:[%s2] sm:$0x1]
        %v323 = vlaneseq
        %v324 = vshrl.u32 %v323, 7
        %v325 = vsub.s32 0, %v324
        %v326 = vrot.slane %v321, %v325
        %v328 = vadd.f32 %v318, %v326
        %330 = vrot.lane.b32.xlu0 %v318, 112
        %v331 = vpop.permute.xlu0 %330
        %333 = vxpose.xlu0.b32.start [1/16] %v331, 128
        %334 = vxpose.xlu0.b32.cont [2/16] 0.0, 128
        %335 = vxpose.xlu0.b32.cont [3/16] 0.0, 128
        %336 = vxpose.xlu0.b32.cont [4/16] 0.0, 128
        %337 = vxpose.xlu0.b32.cont [5/16] 0.0, 128
        %338 = vxpose.xlu0.b32.cont [6/16] 0.0, 128
        %339 = vxpose.xlu0.b32.cont [7/16] 0.0, 128
        %340 = vxpose.xlu0.b32.cont [8/16] 0.0, 128
        %341 = vxpose.xlu0.b32.cont [9/16] 0.0, 128
        %342 = vxpose.xlu0.b32.cont [10/16] 0.0, 128
        %343 = vxpose.xlu0.b32.cont [11/16] 0.0, 128
        %344 = vxpose.xlu0.b32.cont [12/16] 0.0, 128
        %345 = vxpose.xlu0.b32.cont [13/16] 0.0, 128
        %346 = vxpose.xlu0.b32.cont [14/16] 0.0, 128
        %347 = vxpose.xlu0.b32.cont [15/16] 0.0, 128
        %348 = vxpose.xlu0.b32.end [16/16] 0.0, 128
        %v349 = vpop.trf.xlu0
        %v350 = vpop.trf.xlu0
        %v351 = vpop.trf.xlu0
        %v352 = vpop.trf.xlu0
        %v353 = vpop.trf.xlu0
        %v354 = vpop.trf.xlu0
        %v355 = vpop.trf.xlu0
        %v356 = vpop.trf.xlu0
        %v357 = vpop.trf.xlu0
        %v358 = vpop.trf.xlu0
        %v359 = vpop.trf.xlu0
        %v360 = vpop.trf.xlu0
        %v361 = vpop.trf.xlu0
        %v362 = vpop.trf.xlu0
        %v363 = vpop.trf.xlu0
        %v364 = vpop.trf.xlu0
        %366 = vset.pattern.permute.xlu0 0
        %367 = vperm.xlu0 %366, %v328
        %v368 = vpop.permute.xlu0 %367
        %v370 = vlaneseq
        %v371 = vshrl.u32 %v370, 7
        %v372 = vsub.s32 0, %v371
        %v373 = vrot.slane %v349, %v372
        %v374 = vadd.f32 %v368, %v373
        %v375 = vtanh.pop %v374
        %s376 = sld [smem:[#allocation8]]
        %v377 = vstv %s376
        %v378 = vmul.f32 %v377, %v375
        %v379 = vadd.f32 %v378, 0.0
        %380 = vset.pattern.permute.xlu0 1
        %381 = vperm.xlu0 %380, %v328
        %v382 = vpop.permute.xlu0 %381
        %v384 = vlaneseq
        %v385 = vshrl.u32 %v384, 7
        %v386 = vsub.s32 1, %v385
        %v387 = vrot.slane %v349, %v386
        %v388 = vadd.f32 %v382, %v387
        %v389 = vtanh.pop %v388
        %s390 = sld [smem:[#allocation8 + $0x1]]
        %v391 = vstv %s390
        %v392 = vmul.f32 %v391, %v389
        %v393 = vadd.f32 %v379, %v392
        %394 = vset.pattern.permute.xlu0 2
        %395 = vperm.xlu0 %394, %v328
        %v396 = vpop.permute.xlu0 %395
        %v398 = vlaneseq
        %v399 = vshrl.u32 %v398, 7
        %v400 = vsub.s32 2, %v399
        %v401 = vrot.slane %v349, %v400
        %v402 = vadd.f32 %v396, %v401
        %v403 = vtanh.pop %v402
        %s404 = sld [smem:[#allocation8 + $0x2]]
        %v405 = vstv %s404
        %v406 = vmul.f32 %v405, %v403
        %v407 = vadd.f32 %v393, %v406
        %408 = vset.pattern.permute.xlu0 3
        %409 = vperm.xlu0 %408, %v328
        %v410 = vpop.permute.xlu0 %409
        %v412 = vlaneseq
        %v413 = vshrl.u32 %v412, 7
        %v414 = vsub.s32 3, %v413
        %v415 = vrot.slane %v349, %v414
        %v416 = vadd.f32 %v410, %v415
        %v417 = vtanh.pop %v416
        %s418 = sld [smem:[#allocation8 + $0x3]]
        %v419 = vstv %s418
        %v420 = vmul.f32 %v419, %v417
        %v421 = vadd.f32 %v407, %v420
        %422 = vset.pattern.permute.xlu0 4
        %423 = vperm.xlu0 %422, %v328
        %v424 = vpop.permute.xlu0 %423
        %v426 = vlaneseq
        %v427 = vshrl.u32 %v426, 7
        %v428 = vsub.s32 4, %v427
        %v429 = vrot.slane %v349, %v428
        %v430 = vadd.f32 %v424, %v429
        %v431 = vtanh.pop %v430
        %s432 = sld [smem:[#allocation8 + $0x4]]
        %v433 = vstv %s432
        %v434 = vmul.f32 %v433, %v431
        %v435 = vadd.f32 %v421, %v434
        %436 = vset.pattern.permute.xlu0 5
        %437 = vperm.xlu0 %436, %v328
        %v438 = vpop.permute.xlu0 %437
        %v440 = vlaneseq
        %v441 = vshrl.u32 %v440, 7
        %v442 = vsub.s32 5, %v441
        %v443 = vrot.slane %v349, %v442
        %v444 = vadd.f32 %v438, %v443
        %v445 = vtanh.pop %v444
        %s446 = sld [smem:[#allocation8 + $0x5]]
        %v447 = vstv %s446
        %v448 = vmul.f32 %v447, %v445
        %v449 = vadd.f32 %v435, %v448
        %450 = vset.pattern.permute.xlu0 6
        %451 = vperm.xlu0 %450, %v328
        %v452 = vpop.permute.xlu0 %451
        %v454 = vlaneseq
        %v455 = vshrl.u32 %v454, 7
        %v456 = vsub.s32 6, %v455
        %v457 = vrot.slane %v349, %v456
        %v458 = vadd.f32 %v452, %v457
        %v459 = vtanh.pop %v458
        %s460 = sld [smem:[#allocation8 + $0x6]]
        %v461 = vstv %s460
        %v462 = vmul.f32 %v461, %v459
        %v463 = vadd.f32 %v449, %v462
        %464 = vset.pattern.permute.xlu0 7
        %465 = vperm.xlu0 %464, %v328
        %v466 = vpop.permute.xlu0 %465
        %v468 = vlaneseq
        %v469 = vshrl.u32 %v468, 7
        %v470 = vsub.s32 7, %v469
        %v471 = vrot.slane %v349, %v470
        %v472 = vadd.f32 %v466, %v471
        %v473 = vtanh.pop %v472
        %s474 = sld [smem:[#allocation8 + $0x7]]
        %v475 = vstv %s474
        %v476 = vmul.f32 %v475, %v473
        %v477 = vadd.f32 %v463, %v476
        %478 = vset.pattern.permute.xlu0 8
        %479 = vperm.xlu0 %478, %v328
        %v480 = vpop.permute.xlu0 %479
        %v482 = vlaneseq
        %v483 = vshrl.u32 %v482, 7
        %v484 = vsub.s32 0, %v483
        %v485 = vrot.slane %v350, %v484
        %v486 = vadd.f32 %v480, %v485
        %v487 = vtanh.pop %v486
        %s488 = sld [smem:[#allocation8 + $0x8]]
        %v489 = vstv %s488
        %v490 = vmul.f32 %v489, %v487
        %v491 = vadd.f32 %v477, %v490
        %492 = vset.pattern.permute.xlu0 9
        %493 = vperm.xlu0 %492, %v328
        %v494 = vpop.permute.xlu0 %493
        %v496 = vlaneseq
        %v497 = vshrl.u32 %v496, 7
        %v498 = vsub.s32 1, %v497
        %v499 = vrot.slane %v350, %v498
        %v500 = vadd.f32 %v494, %v499
        %v501 = vtanh.pop %v500
        %s502 = sld [smem:[#allocation8 + $0x9]]
        %v503 = vstv %s502
        %v504 = vmul.f32 %v503, %v501
        %v505 = vadd.f32 %v491, %v504
        %506 = vset.pattern.permute.xlu0 10
        %507 = vperm.xlu0 %506, %v328
        %v508 = vpop.permute.xlu0 %507
        %v510 = vlaneseq
        %v511 = vshrl.u32 %v510, 7
        %v512 = vsub.s32 2, %v511
        %v513 = vrot.slane %v350, %v512
        %v514 = vadd.f32 %v508, %v513
        %v515 = vtanh.pop %v514
        %s516 = sld [smem:[#allocation8 + $0xa]]
        %v517 = vstv %s516
        %v518 = vmul.f32 %v517, %v515
        %v519 = vadd.f32 %v505, %v518
        %520 = vset.pattern.permute.xlu0 11
        %521 = vperm.xlu0 %520, %v328
        %v522 = vpop.permute.xlu0 %521
        %v524 = vlaneseq
        %v525 = vshrl.u32 %v524, 7
        %v526 = vsub.s32 3, %v525
        %v527 = vrot.slane %v350, %v526
        %v528 = vadd.f32 %v522, %v527
        %v529 = vtanh.pop %v528
        %s530 = sld [smem:[#allocation8 + $0xb]]
        %v531 = vstv %s530
        %v532 = vmul.f32 %v531, %v529
        %v533 = vadd.f32 %v519, %v532
        %534 = vset.pattern.permute.xlu0 12
        %535 = vperm.xlu0 %534, %v328
        %v536 = vpop.permute.xlu0 %535
        %v538 = vlaneseq
        %v539 = vshrl.u32 %v538, 7
        %v540 = vsub.s32 4, %v539
        %v541 = vrot.slane %v350, %v540
        %v542 = vadd.f32 %v536, %v541
        %v543 = vtanh.pop %v542
        %s544 = sld [smem:[#allocation8 + $0xc]]
        %v545 = vstv %s544
        %v546 = vmul.f32 %v545, %v543
        %v547 = vadd.f32 %v533, %v546
        %548 = vset.pattern.permute.xlu0 13
        %549 = vperm.xlu0 %548, %v328
        %v550 = vpop.permute.xlu0 %549
        %v552 = vlaneseq
        %v553 = vshrl.u32 %v552, 7
        %v554 = vsub.s32 5, %v553
        %v555 = vrot.slane %v350, %v554
        %v556 = vadd.f32 %v550, %v555
        %v557 = vtanh.pop %v556
        %s558 = sld [smem:[#allocation8 + $0xd]]
        %v559 = vstv %s558
        %v560 = vmul.f32 %v559, %v557
        %v561 = vadd.f32 %v547, %v560
        %562 = vset.pattern.permute.xlu0 14
        %563 = vperm.xlu0 %562, %v328
        %v564 = vpop.permute.xlu0 %563
        %v566 = vlaneseq
        %v567 = vshrl.u32 %v566, 7
        %v568 = vsub.s32 6, %v567
        %v569 = vrot.slane %v350, %v568
        %v570 = vadd.f32 %v564, %v569
        %v571 = vtanh.pop %v570
        %s572 = sld [smem:[#allocation8 + $0xe]]
        %v573 = vstv %s572
        %v574 = vmul.f32 %v573, %v571
        %v575 = vadd.f32 %v561, %v574
        %576 = vset.pattern.permute.xlu0 15
        %577 = vperm.xlu0 %576, %v328
        %v578 = vpop.permute.xlu0 %577
        %v580 = vlaneseq
        %v581 = vshrl.u32 %v580, 7
        %v582 = vsub.s32 7, %v581
        %v583 = vrot.slane %v350, %v582
        %v584 = vadd.f32 %v578, %v583
        %v585 = vtanh.pop %v584
        %s586 = sld [smem:[#allocation8 + $0xf]]
        %v587 = vstv %s586
        %v588 = vmul.f32 %v587, %v585
        %v589 = vadd.f32 %v575, %v588
        %v590 = vlaneseq
        %v591 = vshrl.u32 %v590, 7
        %v592 = vlaneseq
        %v593 = vand.u32 %v592, 127
        %vm594 = vcmp.lt.s32.totalorder %v593, %v591
        %v595 = vsel %vm594, %v589, -1e+30
        %vm596 = vcmask 64512
        %v597 = vsel %vm596, %v595, -inf
        %598 = vmax.xlane.f32.xlu0 %v597
        %v599 = vpop.xlane.xlu0 %598
        %v600 = vmax.f32 %v599, 0.0
        %v601 = vsub.f32 %v595, %v600
        %v602 = vmul.f32 %v601, 1.442695
        %v603 = vpow.pop %v602
        %v604 = vsel %vm596, %v603, 0.0
        %605 = vadd.xlane.f32.xlu0 %v604
        %v606 = vpop.xlane.xlu0 %605
        %v607 = vadd.f32 %v606, 1e-10
        %v609 = vsel %vm596, %v603, 0
        %611 = vmatprep.subr.mxu0 0.0
        %612 = vmatpush1.msra.mxu0 %v242
        %613 = vmatprep.subr.mxu0 0.0
        %614 = vmatpush1.msra.mxu0 0.0
        %615 = vmatprep.subr.mxu0 0.0
        %616 = vmatpush1.msra.mxu0 0.0
        %617 = vmatprep.subr.mxu0 0.0
        %618 = vmatpush1.msra.mxu0 0.0
        %619 = vmatprep.subr.mxu0 0.0
        %620 = vmatpush1.msra.mxu0 0.0
        %621 = vmatprep.subr.mxu0 0.0
        %622 = vmatpush1.msra.mxu0 0.0
        %623 = vmatprep.subr.mxu0 0.0
        %624 = vmatpush1.msra.mxu0 0.0
        %625 = vmatprep.subr.mxu0 0.0
        %626 = vmatpush1.msra.mxu0 0.0
        %627 = vmatprep.subr.mxu0 0.0
        %628 = vmatpush1.msra.mxu0 0.0
        %629 = vmatprep.subr.mxu0 0.0
        %630 = vmatpush1.msra.mxu0 0.0
        %631 = vmatprep.subr.mxu0 0.0
        %632 = vmatpush1.msra.mxu0 0.0
        %633 = vmatprep.subr.mxu0 0.0
        %634 = vmatpush1.msra.mxu0 0.0
        %635 = vmatprep.subr.mxu0 0.0
        %636 = vmatpush1.msra.mxu0 0.0
        %637 = vmatprep.subr.mxu0 0.0
        %638 = vmatpush1.msra.mxu0 0.0
        %639 = vmatprep.subr.mxu0 0.0
        %640 = vmatpush1.msra.mxu0 0.0
        %641 = vmatprep.subr.mxu0 0.0
        %642 = vmatpush1.msra.mxu0 0.0
        %643 = vmatprep.subr.mxu0 0.0
        %644 = vmatpush1.msra.mxu0 0.0
        %645 = vmatprep.subr.mxu0 0.0
        %646 = vmatpush1.msra.mxu0 0.0
        %647 = vmatprep.subr.mxu0 0.0
        %648 = vmatpush1.msra.mxu0 0.0
        %649 = vmatprep.subr.mxu0 0.0
        %650 = vmatpush1.msra.mxu0 0.0
        %651 = vmatprep.subr.mxu0 0.0
        %652 = vmatpush1.msra.mxu0 0.0
        %653 = vmatprep.subr.mxu0 0.0
        %654 = vmatpush1.msra.mxu0 0.0
        %655 = vmatprep.subr.mxu0 0.0
        %656 = vmatpush1.msra.mxu0 0.0
        %657 = vmatprep.subr.mxu0 0.0
        %658 = vmatpush1.msra.mxu0 0.0
        %659 = vmatprep.subr.mxu0 0.0
        %660 = vmatpush1.msra.mxu0 0.0
        %661 = vmatprep.subr.mxu0 0.0
        %662 = vmatpush1.msra.mxu0 0.0
        %663 = vmatprep.subr.mxu0 0.0
        %664 = vmatpush1.msra.mxu0 0.0
        %665 = vmatprep.subr.mxu0 0.0
        %666 = vmatpush1.msra.mxu0 0.0
        %667 = vmatprep.subr.mxu0 0.0
        %668 = vmatpush1.msra.mxu0 0.0
        %669 = vmatprep.subr.mxu0 0.0
        %670 = vmatpush1.msra.mxu0 0.0
        %671 = vmatprep.subr.mxu0 0.0
        %672 = vmatpush1.msra.mxu0 0.0
        %673 = vmatprep.subr.mxu0 0.0
        %674 = vmatpush1.msra.mxu0 0.0
        %675 = vmatprep.mubr.f32.mxu0 0.0
        %676 = vmatmul.mubr.f32.gmra.mrb[0].mxu0 %v609
        %v677 = vpop.f32.mrb[0].mxu0
        %v678 = vadd.f32 0.0, %v677
        %v679 = vpop.f32.mrb[0].mxu0
        %680 = vdwg.mxu0
        %v681 = vrcp.pop %v607
        %v682 = vmul.f32 %v678, %v681
        %683 = vst.msk [vmem:[%s241] sm:$0xff] %vm247, %v682
        %s684 = sand.u32 %s120, 1
        %s685 = scalar_lea.sflag [#allocation4], %s684
        %s686 = sand.u32 %s120, 1
        %s687 = smul.addr %s686, 8
        %s688 = scalar_lea.vmem [#allocation9], %s687
        // Predicated region
        $region49: #{tpu_custom_call.1} parent=35 // pred_check
          %p689 = pneg %p130
        $region50: #{tpu_custom_call.1} parent=35 // pred_check_branch
          %691 = sbr.rel (%p689) target = $region52
        $region51: #{tpu_custom_call.1} parent=35 // pred_region
          %s693 = ssub.s32 128, 128
          %694 = vsyncadd %s685, %s693
          %s695 = smul.addr %s23, 128
          %s696 = scalar_lea.hbm %s4, %s695
          %s698 = sshll.u32 %s688, 4
          %s699 = int_to_ptr.vmem [resolvable:$true] %s698
          %701 = dma.vmem_to_hbm [thread:$0]  %s699, 128, %s696, %s685
        $region52: #{tpu_custom_call.1} parent=35 // pred_fallthru
          _
      $region36: #{tpu_custom_call.1} parent=5 // pred_fallthru
        _
      %p702 = scmp.le.s32.totalorder 2, %s18
      // Predicated region
      $region53: #{tpu_custom_call.1} parent=5 // pred_check
        %p703 = pneg %p702
      $region54: #{tpu_custom_call.1} parent=5 // pred_check_branch
        %705 = sbr.rel (%p703) target = $region56
      $region55: #{tpu_custom_call.1} parent=5 // pred_region
        %s706 = ssub.s32 %s18, 2
        // Predicated region
        $region57: #{tpu_custom_call.1} parent=55 // pred_check
          %p707 = pneg %p136
        $region58: #{tpu_custom_call.1} parent=55 // pred_check_branch
          %709 = sbr.rel (%p707) target = $region60
        $region59: #{tpu_custom_call.1} parent=55 // pred_region
          %s710 = sand.u32 %s121, 1
          %s711 = scalar_lea.sflag [#allocation4], %s710
          %s712 = sand.u32 %s121, 1
          %s713 = smul.addr %s712, 8
          %s714 = scalar_lea.vmem [#allocation9], %s713
          %715 = dma.done %s711, 128
        $region60: #{tpu_custom_call.1} parent=55 // pred_fallthru
          _
      $region56: #{tpu_custom_call.1} parent=5 // pred_fallthru
        _
    $region6: #{tpu_custom_call.1} parent=1 // loop_footer
      %s22 = sadd.s32 1, %s18
    $region7: #{tpu_custom_call.1} parent=1 // loop_footer_branch
      %17 = sbr.rel target = $region3
    $region8: #{tpu_custom_call.1} parent=1 // loop_exit
      _
    %716 = vsyncpa [#allocation3], 1
    %s717 = scalar_lea.sflag [#allocation3], 1
    %718 = vsyncpa %s717, 1
    %719 = vsyncpa [#allocation7], 1
    %720 = vsyncpa [#allocation4], 1
    %s721 = scalar_lea.sflag [#allocation4], 1
    %722 = vsyncpa %s721, 1
    %723 = vsyncpa [#allocation5], 1
    %s724 = scalar_lea.sflag [#allocation5], 1
    %725 = vsyncpa %s724, 1

</llo_original>
